<compile_context>
chip_gen: v6e
topology: v6e:2x2x1
jax: 0.10.0
libtpu: 0.0.40
codegen_flags: <defaults>
</compile_context>

<pallas_src>
import functools

import jax
import jax.numpy as jnp
from jax import lax
from jax.experimental import pallas as pl
from jax.experimental.pallas import tpu as pltpu


def _round_up(x, m):
    return ((x + m - 1) // m) * m


def _vmem_cap_bytes():
    try:
        return int(pltpu.get_tpu_info().vmem_capacity_bytes)
    except Exception:
        return 64 * 1024 * 1024


def _vmem_limit_bytes():
    cap = _vmem_cap_bytes()
    # leave headroom: ~48 MiB on 64 MiB parts (v7x), capped at 100 MiB on
    # 128 MiB parts (v5e/v6e)
    return int(min(100 * 1024 * 1024, (cap * 3) // 4))


def _default_tm():
    # bigger row tiles on 128 MiB parts; 512 keeps streamed weights above the
    # HBM roofline on v7x while fitting the 64 MiB / 48 MiB-limit budget
    return 1024 if _vmem_cap_bytes() >= (100 << 20) else 512


def _pick_h_chunk(H, target):
    """Largest divisor of H that is <= target and a multiple of 128 (lane)."""
    if H <= target:
        return H
    c = (target // 128) * 128
    while c >= 128:
        if H % c == 0:
            return c
        c -= 128
    # TODO(synk): for H not divisible by any 128-multiple <= target, pad H in
    # the wrapper instead of reverting to fully resident weights.
    return H


def ffn_kernel(x_ref, w1_ref, b1_ref, w2_ref, b2_ref, g_ref, beta_ref,
               o_ref, acc_ref, *, eps):
    """One (row-tile, hidden-chunk) grid step.

    x_ref  : (tm, D)    resident across the hidden axis (index map ignores k)
    w1_ref : (D, tk_h)  b1_ref: (1, tk_h)      -- streamed per hidden chunk
    w2_ref : (tk_h, D)  b2/g/beta: (1, D)      -- grid-invariant
    acc_ref: (tm, D) f32 VMEM scratch accumulator
    """
    k = pl.program_id(1)

    @pl.when(k == 0)
    def _init():
        acc_ref[...] = jnp.zeros_like(acc_ref)

    x = x_ref[...]                                      # native dtype -> MXU
    h = jnp.dot(x, w1_ref[...], preferred_element_type=jnp.float32)
    h = jnp.maximum(h + b1_ref[...].astype(jnp.float32), 0.0)
    acc_ref[...] += jnp.dot(h.astype(w2_ref.dtype), w2_ref[...],
                            preferred_element_type=jnp.float32)

    @pl.when(k == pl.num_programs(1) - 1)
    def _finalize():
        d = o_ref.shape[-1]
        # dropout(p=0) is the identity; residual add in f32
        z = acc_ref[...] + b2_ref[...].astype(jnp.float32) + x.astype(jnp.float32)
        # one-pass LayerNorm stats (biased variance, matches nn.LayerNorm)
        mean = jnp.sum(z, axis=-1, keepdims=True) * (1.0 / d)
        ex2 = jnp.sum(z * z, axis=-1, keepdims=True) * (1.0 / d)
        var = ex2 - mean * mean
        zn = (z - mean) * lax.rsqrt(var + eps)
        out = zn * g_ref[...].astype(jnp.float32) + beta_ref[...].astype(jnp.float32)
        o_ref[...] = out.astype(o_ref.dtype)


def feedforward_pallas(x, w1, b1, w2, b2, gamma, beta, *,
                       eps=1e-5, tm=None, h_chunk=512, mxu_dtype=None):
    """x: (batch, seq, model_dim). Weights stored (in_dim, out_dim).

    Returns the same shape/dtype as x. mxu_dtype (e.g. jnp.bfloat16) optionally
    downcasts x/w1/w2 for the MXU (f32 accumulation kept); note the residual
    then also uses the downcast x.
    """
    B, S, D = x.shape
    H = w1.shape[1]
    N = B * S
    out_dtype = x.dtype

    if tm is None:
        tm = _default_tm()
    # Row tiling: full-array block if it fits, else an 8-aligned tile; the
    # boundary tile may be partial (no host-side padding pass).
    if tm >= N:
        tm_eff = N
    else:
        tm_eff = max(8, (tm // 8) * 8)
    n_row = pl.cdiv(N, tm_eff)

    tk_h = _pick_h_chunk(H, h_chunk)
    n_hk = H // tk_h

    x2 = x.reshape(N, D)
    if mxu_dtype is not None:
        x2 = x2.astype(mxu_dtype)
        w1 = w1.astype(mxu_dtype)
        w2 = w2.astype(mxu_dtype)

    # keep vectors 2D so they map cleanly onto (sublane, lane)
    b1_2 = b1.reshape(1, H)
    b2_2 = b2.reshape(1, D)
    g_2 = gamma.reshape(1, D)
    be_2 = beta.reshape(1, D)

    # double-buffer weight chunks only when they are actually streamed
    w_mode = pl.Buffered(2) if n_hk > 1 else pl.Buffered(1)
    const1 = pl.Buffered(1)  # tiny grid-invariant params

    grid = (n_row, n_hk)  # rows parallel, hidden reduction last / arbitrary
    out = pl.pallas_call(
        functools.partial(ffn_kernel, eps=eps),
        out_shape=jax.ShapeDtypeStruct((N, D), out_dtype),
        grid_spec=pltpu.PrefetchScalarGridSpec(
            num_scalar_prefetch=0,
            grid=grid,
            in_specs=[
                pl.BlockSpec((tm_eff, D), lambda i, k: (i, 0)),     # x rows
                pl.BlockSpec((D, tk_h), lambda i, k: (0, k),
                             pipeline_mode=w_mode),                 # w1 chunk
                pl.BlockSpec((1, tk_h), lambda i, k: (0, k),
                             pipeline_mode=w_mode),                 # b1 chunk
                pl.BlockSpec((tk_h, D), lambda i, k: (k, 0),
                             pipeline_mode=w_mode),                 # w2 chunk
                pl.BlockSpec((1, D), lambda i, k: (0, 0),
                             pipeline_mode=const1),                 # b2
                pl.BlockSpec((1, D), lambda i, k: (0, 0),
                             pipeline_mode=const1),                 # gamma
                pl.BlockSpec((1, D), lambda i, k: (0, 0),
                             pipeline_mode=const1),                 # beta
            ],
            out_specs=pl.BlockSpec((tm_eff, D), lambda i, k: (i, 0)),
            scratch_shapes=[pltpu.VMEM((tm_eff, D), jnp.float32)],
        ),
        compiler_params=pltpu.CompilerParams(
            dimension_semantics=("parallel", "arbitrary"),
            vmem_limit_bytes=_vmem_limit_bytes(),
        ),
    )(x2, w1, b1_2, w2, b2_2, g_2, be_2)

    return out.reshape(B, S, D)


def feedforward_ref(x, w1, b1, w2, b2, gamma, beta, eps=1e-5):
    h = jnp.maximum(x @ w1 + b1, 0.0)
    y = h @ w2 + b2
    z = y + x
    mean = jnp.mean(z, axis=-1, keepdims=True)
    var = jnp.mean((z - mean) ** 2, axis=-1, keepdims=True)
    return (z - mean) * lax.rsqrt(var + eps) * gamma + beta


def _make_params(key, D, H):
    k1, kb1, k2, kb2 = jax.random.split(key, 4)
    lim1 = 1.0 / (D ** 0.5)
    lim2 = 1.0 / (H ** 0.5)
    w1 = jax.random.uniform(k1, (D, H), minval=-lim1, maxval=lim1, dtype=jnp.float32)
    b1 = jax.random.uniform(kb1, (H,), minval=-lim1, maxval=lim1, dtype=jnp.float32)
    w2 = jax.random.uniform(k2, (H, D), minval=-lim2, maxval=lim2, dtype=jnp.float32)
    b2 = jax.random.uniform(kb2, (D,), minval=-lim2, maxval=lim2, dtype=jnp.float32)
    gamma = jnp.ones((D,), dtype=jnp.float32)   # LayerNorm default init
    beta = jnp.zeros((D,), dtype=jnp.float32)
    return w1, b1, w2, b2, gamma, beta


if __name__ == "__main__":
    key = jax.random.PRNGKey(0)
    kx1, kp1, kx2, kp2 = jax.random.split(key, 4)

    # Test 1: tiny shapes consistent with the module (batch=2, seq=8,
    # model_dim=32, hidden_dim=64); single row tile, single hidden chunk.
    B, S, D, H = 2, 8, 32, 64
    x = jax.random.normal(kx1, (B, S, D), dtype=jnp.float32)
    params = _make_params(kp1, D, H)
    out = jax.block_until_ready(feedforward_pallas(x, *params))
    ref = feedforward_ref(x, *params)
    assert out.shape == (B, S, D)
    assert jnp.allclose(out, ref, atol=1e-4, rtol=1e-4), "mismatch (test 1)"

    # Test 2: exercises the streamed-weight reduction axis and multiple row
    # tiles (grid = (2, 2)) with the VMEM accumulator.
    B, S, D, H = 2, 8, 128, 256
    x = jax.random.normal(kx2, (B, S, D), dtype=jnp.float32)
    params = _make_params(kp2, D, H)
    out = jax.block_until_ready(
        feedforward_pallas(x, *params, tm=8, h_chunk=128))
    ref = feedforward_ref(x, *params)
    assert out.shape == (B, S, D)
    assert jnp.allclose(out, ref, atol=1e-4, rtol=1e-4), "mismatch (test 2)"

    print("KERNEL_OK")
</pallas_src>

<mosaic_0001>
module attributes {stable_mosaic.version = 11 : i64} {
  func.func @ffn_kernel(%arg0: i32, %arg1: i32, %arg2: memref<16x32xf32, #tpu.memory_space<vmem>>, %arg3: memref<32x64xf32, #tpu.memory_space<vmem>>, %arg4: memref<1x64xf32, #tpu.memory_space<vmem>>, %arg5: memref<64x32xf32, #tpu.memory_space<vmem>>, %arg6: memref<1x32xf32, #tpu.memory_space<vmem>>, %arg7: memref<1x32xf32, #tpu.memory_space<vmem>>, %arg8: memref<1x32xf32, #tpu.memory_space<vmem>>, %arg9: memref<16x32xf32, #tpu.memory_space<vmem>>, %arg10: memref<16x32xf32, #tpu.memory_space<vmem>>) attributes {dimension_semantics = [#tpu.dimension_semantics<parallel>, #tpu.dimension_semantics<arbitrary>], iteration_bounds = array<i64: 1, 1>, scalar_prefetch = 0 : i64, scratch_operands = 1 : i64, tpu.core_type = #tpu.core_type<tc>, window_params = [{transform_indices = @transform_0, window_bounds = array<i64: 16, 32>}, {pipeline_mode = #tpu.pipeline_mode<synchronous>, transform_indices = @transform_1, window_bounds = array<i64: 32, 64>}, {pipeline_mode = #tpu.pipeline_mode<synchronous>, transform_indices = @transform_2, window_bounds = array<i64: 1, 64>}, {pipeline_mode = #tpu.pipeline_mode<synchronous>, transform_indices = @transform_3, window_bounds = array<i64: 64, 32>}, {pipeline_mode = #tpu.pipeline_mode<synchronous>, transform_indices = @transform_4, window_bounds = array<i64: 1, 32>}, {pipeline_mode = #tpu.pipeline_mode<synchronous>, transform_indices = @transform_5, window_bounds = array<i64: 1, 32>}, {pipeline_mode = #tpu.pipeline_mode<synchronous>, transform_indices = @transform_6, window_bounds = array<i64: 1, 32>}, {transform_indices = @transform_7, window_bounds = array<i64: 16, 32>}]} {
    %c0_i32 = arith.constant 0 : i32
    %0 = arith.cmpi eq, %arg1, %c0_i32 : i32
    %1 = arith.extui %0 : i1 to i32
    %c0_i32_0 = arith.constant 0 : i32
    %2 = arith.cmpi ne, %1, %c0_i32_0 : i32
    scf.if %2 {
      %cst_16 = arith.constant 0.000000e+00 : f32
      %19 = vector.broadcast %cst_16 : f32 to vector<16x32xf32>
      %c0_17 = arith.constant 0 : index
      %c0_18 = arith.constant 0 : index
      %20 = vector.load %arg10[%c0_17, %c0_18] : memref<16x32xf32, #tpu.memory_space<vmem>>, vector<16x32xf32>
      tpu.vector_store %arg10[%c0_17, %c0_18], %19 {strides = array<i32>} : memref<16x32xf32, #tpu.memory_space<vmem>>, vector<16x32xf32>,
    } else {
    }
    %c0 = arith.constant 0 : index
    %c0_1 = arith.constant 0 : index
    %3 = vector.load %arg2[%c0, %c0_1] : memref<16x32xf32, #tpu.memory_space<vmem>>, vector<16x32xf32>
    %c0_2 = arith.constant 0 : index
    %c0_3 = arith.constant 0 : index
    %4 = vector.load %arg3[%c0_2, %c0_3] : memref<32x64xf32, #tpu.memory_space<vmem>>, vector<32x64xf32>
    %cst = arith.constant dense<0.000000e+00> : vector<16x64xf32>
    %5 = tpu.matmul %3, %4, %cst {dimension_numbers = #tpu.dot_dimension_numbers<[1], [0], [0], [1], [0, 0, 1, 1], [], []>} : vector<16x32xf32>, vector<32x64xf32>, vector<16x64xf32> -> vector<16x64xf32>
    %c0_4 = arith.constant 0 : index
    %c0_5 = arith.constant 0 : index
    %6 = vector.load %arg4[%c0_4, %c0_5] : memref<1x64xf32, #tpu.memory_space<vmem>>, vector<1x64xf32>
    %7 = vector.broadcast %6 : vector<1x64xf32> to vector<16x64xf32>
    %8 = arith.addf %5, %7 : vector<16x64xf32>
    %cst_6 = arith.constant 0.000000e+00 : f32
    %9 = vector.broadcast %cst_6 : f32 to vector<16x64xf32>
    %10 = arith.maximumf %8, %9 : vector<16x64xf32>
    %c0_7 = arith.constant 0 : index
    %c0_8 = arith.constant 0 : index
    %11 = vector.load %arg10[%c0_7, %c0_8] : memref<16x32xf32, #tpu.memory_space<vmem>>, vector<16x32xf32>
    %c0_9 = arith.constant 0 : index
    %c0_10 = arith.constant 0 : index
    %12 = vector.load %arg5[%c0_9, %c0_10] : memref<64x32xf32, #tpu.memory_space<vmem>>, vector<64x32xf32>
    %cst_11 = arith.constant dense<0.000000e+00> : vector<16x32xf32>
    %13 = tpu.matmul %10, %12, %cst_11 {dimension_numbers = #tpu.dot_dimension_numbers<[1], [0], [0], [1], [0, 0, 1, 1], [], []>} : vector<16x64xf32>, vector<64x32xf32>, vector<16x32xf32> -> vector<16x32xf32>
    %14 = arith.addf %11, %13 : vector<16x32xf32>
    %c0_12 = arith.constant 0 : index
    %c0_13 = arith.constant 0 : index
    %15 = vector.load %arg10[%c0_12, %c0_13] : memref<16x32xf32, #tpu.memory_space<vmem>>, vector<16x32xf32>
    tpu.vector_store %arg10[%c0_12, %c0_13], %14 {strides = array<i32>} : memref<16x32xf32, #tpu.memory_space<vmem>>, vector<16x32xf32>,
    %c0_i32_14 = arith.constant 0 : i32
    %16 = arith.cmpi eq, %arg1, %c0_i32_14 : i32
    %17 = arith.extui %16 : i1 to i32
    %c0_i32_15 = arith.constant 0 : i32
    %18 = arith.cmpi ne, %17, %c0_i32_15 : i32
    scf.if %18 {
      %c0_16 = arith.constant 0 : index
      %c0_17 = arith.constant 0 : index
      %19 = vector.load %arg10[%c0_16, %c0_17] : memref<16x32xf32, #tpu.memory_space<vmem>>, vector<16x32xf32>
      %c0_18 = arith.constant 0 : index
      %c0_19 = arith.constant 0 : index
      %20 = vector.load %arg6[%c0_18, %c0_19] : memref<1x32xf32, #tpu.memory_space<vmem>>, vector<1x32xf32>
      %21 = vector.broadcast %20 : vector<1x32xf32> to vector<16x32xf32>
      %22 = arith.addf %19, %21 : vector<16x32xf32>
      %23 = arith.addf %22, %3 : vector<16x32xf32>
      %cst_20 = arith.constant dense<0.000000e+00> : vector<16xf32>
      %24 = vector.multi_reduction <add>, %23, %cst_20 [1] : vector<16x32xf32> to vector<16xf32>
      %25 = vector.shape_cast %24 : vector<16xf32> to vector<16x1xf32>
      %cst_21 = arith.constant 3.125000e-02 : f32
      %26 = vector.broadcast %cst_21 : f32 to vector<16x1xf32>
      %27 = arith.mulf %25, %26 : vector<16x1xf32>
      %28 = arith.mulf %23, %23 : vector<16x32xf32>
      %cst_22 = arith.constant dense<0.000000e+00> : vector<16xf32>
      %29 = vector.multi_reduction <add>, %28, %cst_22 [1] : vector<16x32xf32> to vector<16xf32>
      %30 = vector.shape_cast %29 : vector<16xf32> to vector<16x1xf32>
      %cst_23 = arith.constant 3.125000e-02 : f32
      %31 = vector.broadcast %cst_23 : f32 to vector<16x1xf32>
      %32 = arith.mulf %30, %31 : vector<16x1xf32>
      %33 = arith.mulf %27, %27 : vector<16x1xf32>
      %34 = arith.subf %32, %33 : vector<16x1xf32>
      %35 = vector.broadcast %27 : vector<16x1xf32> to vector<16x32xf32>
      %36 = arith.subf %23, %35 : vector<16x32xf32>
      %cst_24 = arith.constant 9.99999974E-6 : f32
      %37 = vector.broadcast %cst_24 : f32 to vector<16x1xf32>
      %38 = arith.addf %34, %37 : vector<16x1xf32>
      %39 = math.rsqrt %38 : vector<16x1xf32>
      %40 = vector.broadcast %39 : vector<16x1xf32> to vector<16x32xf32>
      %41 = arith.mulf %36, %40 : vector<16x32xf32>
      %c0_25 = arith.constant 0 : index
      %c0_26 = arith.constant 0 : index
      %42 = vector.load %arg7[%c0_25, %c0_26] : memref<1x32xf32, #tpu.memory_space<vmem>>, vector<1x32xf32>
      %43 = vector.broadcast %42 : vector<1x32xf32> to vector<16x32xf32>
      %44 = arith.mulf %41, %43 : vector<16x32xf32>
      %c0_27 = arith.constant 0 : index
      %c0_28 = arith.constant 0 : index
      %45 = vector.load %arg8[%c0_27, %c0_28] : memref<1x32xf32, #tpu.memory_space<vmem>>, vector<1x32xf32>
      %46 = vector.broadcast %45 : vector<1x32xf32> to vector<16x32xf32>
      %47 = arith.addf %44, %46 : vector<16x32xf32>
      %c0_29 = arith.constant 0 : index
      %c0_30 = arith.constant 0 : index
      %48 = vector.load %arg9[%c0_29, %c0_30] : memref<16x32xf32, #tpu.memory_space<vmem>>, vector<16x32xf32>
      tpu.vector_store %arg9[%c0_29, %c0_30], %47 {strides = array<i32>} : memref<16x32xf32, #tpu.memory_space<vmem>>, vector<16x32xf32>,
    } else {
    }
    return
  }
  func.func @transform_0(%arg0: i32, %arg1: i32) -> (i32, i32) {
    %c0_i32 = arith.constant 0 : i32
    %c0_i32_0 = arith.constant 0 : i32
    return %arg0, %c0_i32 : i32, i32
  }
  func.func @transform_1(%arg0: i32, %arg1: i32) -> (i32, i32) {
    %c0_i32 = arith.constant 0 : i32
    %c0_i32_0 = arith.constant 0 : i32
    return %c0_i32, %arg1 : i32, i32
  }
  func.func @transform_2(%arg0: i32, %arg1: i32) -> (i32, i32) {
    %c0_i32 = arith.constant 0 : i32
    %c0_i32_0 = arith.constant 0 : i32
    return %c0_i32, %arg1 : i32, i32
  }
  func.func @transform_3(%arg0: i32, %arg1: i32) -> (i32, i32) {
    %c0_i32 = arith.constant 0 : i32
    %c0_i32_0 = arith.constant 0 : i32
    return %arg1, %c0_i32 : i32, i32
  }
  func.func @transform_4(%arg0: i32, %arg1: i32) -> (i32, i32) {
    %c0_i32 = arith.constant 0 : i32
    %c0_i32_0 = arith.constant 0 : i32
    %c0_i32_1 = arith.constant 0 : i32
    return %c0_i32, %c0_i32_0 : i32, i32
  }
  func.func @transform_5(%arg0: i32, %arg1: i32) -> (i32, i32) {
    %c0_i32 = arith.constant 0 : i32
    %c0_i32_0 = arith.constant 0 : i32
    %c0_i32_1 = arith.constant 0 : i32
    return %c0_i32, %c0_i32_0 : i32, i32
  }
  func.func @transform_6(%arg0: i32, %arg1: i32) -> (i32, i32) {
    %c0_i32 = arith.constant 0 : i32
    %c0_i32_0 = arith.constant 0 : i32
    %c0_i32_1 = arith.constant 0 : i32
    return %c0_i32, %c0_i32_0 : i32, i32
  }
  func.func @transform_7(%arg0: i32, %arg1: i32) -> (i32, i32) {
    %c0_i32 = arith.constant 0 : i32
    %c0_i32_0 = arith.constant 0 : i32
    return %arg0, %c0_i32 : i32, i32
  }
}

</mosaic_0001>

<llo_original>
// kernel: tpu_custom_call.1
$region0: #{tpu_custom_call.1}
  #allocation0 [shape = 'u32[]', space=smem, size = 0x4, offset = 0x4, fixed_abs, tag = 'smem constant byte address 0x4 - core index']
  #allocation1 [shape = 'u32[144,128]{1,0:T(1,128)}', space=vmem, size = 0x12000, scoped, tag = 'internal scratch']
  #allocation2 [shape = 'f32[16,32]{1,0:T(8,128)}', space=vmem, size = 0x2000, scoped, tag = 'scratch operand']
  %s0 = inlined_call_operand.vmem [shape: f32[16,32], index: 0, kind: input, shape index: {}]
  %s1 = inlined_call_operand.vmem [shape: f32[32,64], index: 1, kind: input, shape index: {}]
  %s2 = inlined_call_operand.vmem [shape: f32[1,64], index: 2, kind: input, shape index: {}]
  %s3 = inlined_call_operand.vmem [shape: f32[64,32], index: 3, kind: input, shape index: {}]
  %s4 = inlined_call_operand.vmem [shape: f32[1,32], index: 4, kind: input, shape index: {}]
  %s5 = inlined_call_operand.vmem [shape: f32[1,32], index: 5, kind: input, shape index: {}]
  %s6 = inlined_call_operand.vmem [shape: f32[1,32], index: 6, kind: input, shape index: {}]
  %s7 = inlined_call_operand.hbm [shape: f32[16,32], index: 7, kind: output, shape index: {}]
  %s8 = sld [smem:[#allocation0]]
  $region46: #{tpu_custom_call.1} parent=0
    _
  %s10 = ssub.s32 1, %s8
  %s11 = scalar_select 0, %s10, %s8
  $region1: #{tpu_custom_call.1} parent=0
    #allocation3 [shape = 'u8[8192]{0}', space=vmem, size = 0x2000, scoped, tag = 'output window, operand 0, single buffered']
    #allocation4 [shape = 's32[1]{0}', space=sflag, size = 0x4, scoped, tag = 'scoped memory for tpu_custom_call.1']
    %12 = vsyncpa [#allocation4], 0
    // Predicated region
    $region2: #{tpu_custom_call.1} parent=1 // pred_check
      _
    $region3: #{tpu_custom_call.1} parent=1 // pred_check_branch
      %14 = sbr.rel (0) target = $region5
    $region4: #{tpu_custom_call.1} parent=1 // pred_region
      _
    $region5: #{tpu_custom_call.1} parent=1 // pred_fallthru
      _
    // Predicated region
    $region6: #{tpu_custom_call.1} parent=1 // pred_check
      _
    $region7: #{tpu_custom_call.1} parent=1 // pred_check_branch
      %16 = sbr.rel (0) target = $region9
    $region8: #{tpu_custom_call.1} parent=1 // pred_region
      _
    $region9: #{tpu_custom_call.1} parent=1 // pred_fallthru
      _
    // Predicated region
    $region10: #{tpu_custom_call.1} parent=1 // pred_check
      _
    $region11: #{tpu_custom_call.1} parent=1 // pred_check_branch
      %18 = sbr.rel (0) target = $region13
    $region12: #{tpu_custom_call.1} parent=1 // pred_region
      _
    $region13: #{tpu_custom_call.1} parent=1 // pred_fallthru
      _
    // Predicated region
    $region14: #{tpu_custom_call.1} parent=1 // pred_check
      _
    $region15: #{tpu_custom_call.1} parent=1 // pred_check_branch
      %20 = sbr.rel (0) target = $region17
    $region16: #{tpu_custom_call.1} parent=1 // pred_region
      _
    $region17: #{tpu_custom_call.1} parent=1 // pred_fallthru
      _
    // Predicated region
    $region18: #{tpu_custom_call.1} parent=1 // pred_check
      _
    $region19: #{tpu_custom_call.1} parent=1 // pred_check_branch
      %22 = sbr.rel (0) target = $region21
    $region20: #{tpu_custom_call.1} parent=1 // pred_region
      _
    $region21: #{tpu_custom_call.1} parent=1 // pred_fallthru
      _
    // Predicated region
    $region22: #{tpu_custom_call.1} parent=1 // pred_check
      _
    $region23: #{tpu_custom_call.1} parent=1 // pred_check_branch
      %24 = sbr.rel (0) target = $region25
    $region24: #{tpu_custom_call.1} parent=1 // pred_region
      _
    $region25: #{tpu_custom_call.1} parent=1 // pred_fallthru
      _
    // Predicated region
    $region26: #{tpu_custom_call.1} parent=1 // pred_check
      _
    $region27: #{tpu_custom_call.1} parent=1 // pred_check_branch
      %26 = sbr.rel (0) target = $region29
    $region28: #{tpu_custom_call.1} parent=1 // pred_region
      _
    $region29: #{tpu_custom_call.1} parent=1 // pred_fallthru
      _
    %p27 = scmp.eq.s32.totalorder 0, 0
    // Predicated region
    $region30: #{tpu_custom_call.1} parent=1 // pred_check
      %p28 = pneg %p27
    $region31: #{tpu_custom_call.1} parent=1 // pred_check_branch
      %30 = sbr.rel (%p28) target = $region33
    $region32: #{tpu_custom_call.1} parent=1 // pred_region
      %vm31 = vcmask 261120
      %32 = vst.msk [vmem:[#allocation2] sm:$0xff] %vm31, 0.0
      %33 = vst.msk [vmem:[#allocation2 + $0x8] sm:$0xff] %vm31, 0.0
    $region33: #{tpu_custom_call.1} parent=1 // pred_fallthru
      _
    %v34 = vld [vmem:[%s0] sm:$0xff]
    %v35 = vld [vmem:[%s0 + $0x8] sm:$0xff]
    %v36 = vld [vmem:[%s1] sm:$0xff]
    %v37 = vld [vmem:[%s1 + $0x8] sm:$0xff]
    %v38 = vld [vmem:[%s1 + $0x10] sm:$0xff]
    %v39 = vld [vmem:[%s1 + $0x18] sm:$0xff]
    %v40 = vld [vmem:[%s2] sm:$0x1]
    %v42 = vlaneseq
    %v43 = vshrl.u32 %v42, 7
    %v44 = vsub.s32 0, %v43
    %v45 = vrot.slane %v40, %v44
    %vm47 = vcmask 261120
    %v49 = vsel %vm47, %v34, 0
    %v52 = vsel %vm47, %v35, 0
    %54 = vmatprep.subr.mxu0 0.0
    %55 = vmatpush1.msra.mxu0 0.0
    %56 = vmatprep.subr.mxu0 0.0
    %57 = vmatpush1.msra.mxu0 0.0
    %58 = vmatprep.subr.mxu0 0.0
    %59 = vmatpush1.msra.mxu0 0.0
    %60 = vmatprep.subr.mxu0 0.0
    %61 = vmatpush1.msra.mxu0 0.0
    %62 = vmatprep.subr.mxu0 0.0
    %63 = vmatpush1.msra.mxu0 0.0
    %64 = vmatprep.subr.mxu0 0.0
    %65 = vmatpush1.msra.mxu0 0.0
    %66 = vmatprep.subr.mxu0 0.0
    %67 = vmatpush1.msra.mxu0 0.0
    %68 = vmatprep.subr.mxu0 0.0
    %69 = vmatpush1.msra.mxu0 0.0
    %70 = vmatprep.subr.mxu0 0.0
    %71 = vmatpush1.msra.mxu0 0.0
    %72 = vmatprep.subr.mxu0 0.0
    %73 = vmatpush1.msra.mxu0 0.0
    %74 = vmatprep.subr.mxu0 0.0
    %75 = vmatpush1.msra.mxu0 0.0
    %76 = vmatprep.subr.mxu0 0.0
    %77 = vmatpush1.msra.mxu0 0.0
    %78 = vmatprep.subr.mxu0 0.0
    %79 = vmatpush1.msra.mxu0 %v39
    %80 = vmatprep.subr.mxu0 0.0
    %81 = vmatpush1.msra.mxu0 %v38
    %82 = vmatprep.subr.mxu0 0.0
    %83 = vmatpush1.msra.mxu0 %v37
    %84 = vmatprep.subr.mxu0 0.0
    %85 = vmatpush1.msra.mxu0 %v36
    %86 = vmatprep.subr.mxu0 0.0
    %87 = vmatpush2.msra.mxu0 0.0
    %88 = vmatprep.subr.mxu0 0.0
    %89 = vmatpush2.msra.mxu0 0.0
    %90 = vmatprep.subr.mxu0 0.0
    %91 = vmatpush2.msra.mxu0 0.0
    %92 = vmatprep.subr.mxu0 0.0
    %93 = vmatpush2.msra.mxu0 0.0
    %94 = vmatprep.subr.mxu0 0.0
    %95 = vmatpush2.msra.mxu0 0.0
    %96 = vmatprep.subr.mxu0 0.0
    %97 = vmatpush2.msra.mxu0 0.0
    %98 = vmatprep.subr.mxu0 0.0
    %99 = vmatpush2.msra.mxu0 0.0
    %100 = vmatprep.subr.mxu0 0.0
    %101 = vmatpush2.msra.mxu0 0.0
    %102 = vmatprep.subr.mxu0 0.0
    %103 = vmatpush2.msra.mxu0 0.0
    %104 = vmatprep.subr.mxu0 0.0
    %105 = vmatpush2.msra.mxu0 0.0
    %106 = vmatprep.subr.mxu0 0.0
    %107 = vmatpush2.msra.mxu0 0.0
    %108 = vmatprep.subr.mxu0 0.0
    %109 = vmatpush2.msra.mxu0 0.0
    %110 = vmatprep.subr.mxu0 0.0
    %111 = vmatpush2.msra.mxu0 0.0
    %112 = vmatprep.subr.mxu0 0.0
    %113 = vmatpush2.msra.mxu0 0.0
    %114 = vmatprep.subr.mxu0 0.0
    %115 = vmatpush2.msra.mxu0 0.0
    %116 = vmatprep.subr.mxu0 0.0
    %117 = vmatpush2.msra.mxu0 0.0
    %118 = vmatprep.mubr.f32.mxu0 0.0
    %119 = vmatmul.mubr.f32.gmra.mxu0 %v49
    %v120 = vpop.f32.mrf.mxu0
    %v121 = vadd.f32 %v45, %v120
    %v122 = vpop.f32.mrf.mxu0
    %123 = vmatprep.mubr.f32.mxu0 0.0
    %124 = vmatmul.mubr.f32.gmra.mxu0 %v52
    %v125 = vpop.f32.mrf.mxu0
    %v126 = vadd.f32 %v45, %v125
    %v127 = vpop.f32.mrf.mxu0
    %128 = vdwg.mxu0
    %v129 = vmax.f32 %v121, 0.0
    %v130 = vmax.f32 %v126, 0.0
    %v131 = vld [vmem:[#allocation2] sm:$0xff]
    %v132 = vld [vmem:[#allocation2 + $0x8] sm:$0xff]
    %v133 = vld [vmem:[%s3] sm:$0xff]
    %v134 = vld [vmem:[%s3 + $0x8] sm:$0xff]
    %v135 = vld [vmem:[%s3 + $0x10] sm:$0xff]
    %v136 = vld [vmem:[%s3 + $0x18] sm:$0xff]
    %v137 = vld [vmem:[%s3 + $0x20] sm:$0xff]
    %v138 = vld [vmem:[%s3 + $0x28] sm:$0xff]
    %v139 = vld [vmem:[%s3 + $0x30] sm:$0xff]
    %v140 = vld [vmem:[%s3 + $0x38] sm:$0xff]
    %vm141 = vcmask 523264
    %v143 = vsel %vm141, %v129, 0
    %v146 = vsel %vm141, %v130, 0
    %148 = vmatprep.subr.mxu0 0.0
    %149 = vmatpush1.msra.mxu0 0.0
    %150 = vmatprep.subr.mxu0 0.0
    %151 = vmatpush1.msra.mxu0 0.0
    %152 = vmatprep.subr.mxu0 0.0
    %153 = vmatpush1.msra.mxu0 0.0
    %154 = vmatprep.subr.mxu0 0.0
    %155 = vmatpush1.msra.mxu0 0.0
    %156 = vmatprep.subr.mxu0 0.0
    %157 = vmatpush1.msra.mxu0 0.0
    %158 = vmatprep.subr.mxu0 0.0
    %159 = vmatpush1.msra.mxu0 0.0
    %160 = vmatprep.subr.mxu0 0.0
    %161 = vmatpush1.msra.mxu0 0.0
    %162 = vmatprep.subr.mxu0 0.0
    %163 = vmatpush1.msra.mxu0 0.0
    %164 = vmatprep.subr.mxu0 0.0
    %165 = vmatpush1.msra.mxu0 %v140
    %166 = vmatprep.subr.mxu0 0.0
    %167 = vmatpush1.msra.mxu0 %v139
    %168 = vmatprep.subr.mxu0 0.0
    %169 = vmatpush1.msra.mxu0 %v138
    %170 = vmatprep.subr.mxu0 0.0
    %171 = vmatpush1.msra.mxu0 %v137
    %172 = vmatprep.subr.mxu0 0.0
    %173 = vmatpush1.msra.mxu0 %v136
    %174 = vmatprep.subr.mxu0 0.0
    %175 = vmatpush1.msra.mxu0 %v135
    %176 = vmatprep.subr.mxu0 0.0
    %177 = vmatpush1.msra.mxu0 %v134
    %178 = vmatprep.subr.mxu0 0.0
    %179 = vmatpush1.msra.mxu0 %v133
    %180 = vmatprep.subr.mxu0 0.0
    %181 = vmatpush2.msra.mxu0 0.0
    %182 = vmatprep.subr.mxu0 0.0
    %183 = vmatpush2.msra.mxu0 0.0
    %184 = vmatprep.subr.mxu0 0.0
    %185 = vmatpush2.msra.mxu0 0.0
    %186 = vmatprep.subr.mxu0 0.0
    %187 = vmatpush2.msra.mxu0 0.0
    %188 = vmatprep.subr.mxu0 0.0
    %189 = vmatpush2.msra.mxu0 0.0
    %190 = vmatprep.subr.mxu0 0.0
    %191 = vmatpush2.msra.mxu0 0.0
    %192 = vmatprep.subr.mxu0 0.0
    %193 = vmatpush2.msra.mxu0 0.0
    %194 = vmatprep.subr.mxu0 0.0
    %195 = vmatpush2.msra.mxu0 0.0
    %196 = vmatprep.subr.mxu0 0.0
    %197 = vmatpush2.msra.mxu0 0.0
    %198 = vmatprep.subr.mxu0 0.0
    %199 = vmatpush2.msra.mxu0 0.0
    %200 = vmatprep.subr.mxu0 0.0
    %201 = vmatpush2.msra.mxu0 0.0
    %202 = vmatprep.subr.mxu0 0.0
    %203 = vmatpush2.msra.mxu0 0.0
    %204 = vmatprep.subr.mxu0 0.0
    %205 = vmatpush2.msra.mxu0 0.0
    %206 = vmatprep.subr.mxu0 0.0
    %207 = vmatpush2.msra.mxu0 0.0
    %208 = vmatprep.subr.mxu0 0.0
    %209 = vmatpush2.msra.mxu0 0.0
    %210 = vmatprep.subr.mxu0 0.0
    %211 = vmatpush2.msra.mxu0 0.0
    %212 = vmatprep.mubr.f32.mxu0 0.0
    %213 = vmatmul.mubr.f32.gmra.mxu0 %v143
    %v214 = vpop.f32.mrf.mxu0
    %v215 = vadd.f32 0.0, %v214
    %v216 = vpop.f32.mrf.mxu0
    %217 = vmatprep.mubr.f32.mxu0 0.0
    %218 = vmatmul.mubr.f32.gmra.mxu0 %v146
    %v219 = vpop.f32.mrf.mxu0
    %v220 = vadd.f32 0.0, %v219
    %v221 = vpop.f32.mrf.mxu0
    %222 = vdwg.mxu0
    %v223 = vadd.f32 %v131, %v215
    %v224 = vadd.f32 %v132, %v220
    %225 = vst.msk [vmem:[#allocation2] sm:$0xff] %vm47, %v223
    %226 = vst.msk [vmem:[#allocation2 + $0x8] sm:$0xff] %vm47, %v224
    // Predicated region
    $region34: #{tpu_custom_call.1} parent=1 // pred_check
      %p227 = pneg %p27
    $region35: #{tpu_custom_call.1} parent=1 // pred_check_branch
      %229 = sbr.rel (%p227) target = $region37
    $region36: #{tpu_custom_call.1} parent=1 // pred_region
      %v230 = vld [vmem:[#allocation2] sm:$0xff]
      %v231 = vld [vmem:[#allocation2 + $0x8] sm:$0xff]
      %v232 = vld [vmem:[%s4] sm:$0x1]
      %v234 = vlaneseq
      %v235 = vshrl.u32 %v234, 7
      %v236 = vsub.s32 0, %v235
      %v237 = vrot.slane %v232, %v236
      %v239 = vadd.f32 %v230, %v237
      %v240 = vadd.f32 %v231, %v237
      %v241 = vadd.f32 %v239, %v34
      %v242 = vadd.f32 %v240, %v35
      %v243 = vsel %vm47, %v241, 0.0
      %244 = vadd.xlane.f32.xlu0 %v243
      %v245 = vpop.xlane.xlu0 %244
      %v246 = vsel %vm47, %v242, 0.0
      %247 = vadd.xlane.f32.xlu0 %v246
      %v248 = vpop.xlane.xlu0 %247
      %v249 = vmul.f32 %v245, 0.03125
      %v250 = vmul.f32 %v248, 0.03125
      %v251 = vmul.f32 %v241, %v241
      %v252 = vmul.f32 %v242, %v242
      %v253 = vsel %vm47, %v251, 0.0
      %254 = vadd.xlane.f32.xlu0 %v253
      %v255 = vpop.xlane.xlu0 %254
      %v256 = vsel %vm47, %v252, 0.0
      %257 = vadd.xlane.f32.xlu0 %v256
      %v258 = vpop.xlane.xlu0 %257
      %v259 = vmul.f32 %v255, 0.03125
      %v260 = vmul.f32 %v258, 0.03125
      %v261 = vmul.f32 %v249, %v249
      %v262 = vmul.f32 %v250, %v250
      %v263 = vsub.f32 %v259, %v261
      %v264 = vsub.f32 %v260, %v262
      %v265 = vsub.f32 %v241, %v249
      %v266 = vsub.f32 %v242, %v250
      %v267 = vadd.f32 %v263, 1e-05
      %v268 = vadd.f32 %v264, 1e-05
      %v269 = vrsqrt.pop %v267
      %v270 = vrsqrt.pop %v268
      %v271 = vmul.f32 %v265, %v269
      %v272 = vmul.f32 %v266, %v270
      %v273 = vld [vmem:[%s5] sm:$0x1]
      %v275 = vlaneseq
      %v276 = vshrl.u32 %v275, 7
      %v277 = vsub.s32 0, %v276
      %v278 = vrot.slane %v273, %v277
      %v280 = vmul.f32 %v271, %v278
      %v281 = vmul.f32 %v272, %v278
      %v282 = vld [vmem:[%s6] sm:$0x1]
      %v284 = vlaneseq
      %v285 = vshrl.u32 %v284, 7
      %v286 = vsub.s32 0, %v285
      %v287 = vrot.slane %v282, %v286
      %v289 = vadd.f32 %v280, %v287
      %v290 = vadd.f32 %v281, %v287
      %291 = vst.msk [vmem:[#allocation3] sm:$0xff] %vm47, %v289
      %292 = vst.msk [vmem:[#allocation3 + $0x8] sm:$0xff] %vm47, %v290
    $region37: #{tpu_custom_call.1} parent=1 // pred_fallthru
      _
    // Predicated region
    $region38: #{tpu_custom_call.1} parent=1 // pred_check
      _
    $region39: #{tpu_custom_call.1} parent=1 // pred_check_branch
      %294 = sbr.rel (0) target = $region41
    $region40: #{tpu_custom_call.1} parent=1 // pred_region
      %s296 = ssub.s32 256, 256
      %297 = vsyncadd [#allocation4], %s296
      %s298 = sshll.u32 [#allocation3], 4
      %s299 = int_to_ptr.vmem [resolvable:$true] %s298
      %304 = dma.vmem_to_hbm [thread:$0]  %s299, 256, %s7, [#allocation4], 128, 128, 8
    $region41: #{tpu_custom_call.1} parent=1 // pred_fallthru
      _
    // Predicated region
    $region42: #{tpu_custom_call.1} parent=1 // pred_check
      _
    $region43: #{tpu_custom_call.1} parent=1 // pred_check_branch
      %306 = sbr.rel (0) target = $region45
    $region44: #{tpu_custom_call.1} parent=1 // pred_region
      %307 = dma.done [#allocation4], 256
    $region45: #{tpu_custom_call.1} parent=1 // pred_fallthru
      _
    %308 = vsyncpa [#allocation4], 1

</llo_original>
